<compile_context>
chip_gen: v5e
topology: v5e:2x2
jax: 0.10.0
libtpu: 0.0.40
codegen_flags: <defaults>
</compile_context>

<pallas_src>
import functools

import jax
import jax.numpy as jnp
import numpy as np
from jax.experimental import pallas as pl
from jax.experimental.pallas import tpu as pltpu


def _pbit_linear_kernel(mod_inputs, *refs):
    """Grid point (i, j, k).

    refs (mod_inputs=True):
        x(tm,tk) f32, w_mu(tk,tn) bf16, w_var(tk,tn) bf16, noise(tm,tn) f32,
        out_scale(1,tn), out_bias(1,tn), in_scale(1,tk), in_bias(1,tk),
        o(tm,tn) f32, acc_mu(tm,tn) f32 scratch, acc_var(tm,tn) f32 scratch
    refs (mod_inputs=False): same without in_scale/in_bias.
    """
    if mod_inputs:
        (x_ref, wmu_ref, wvar_ref, noise_ref, oscale_ref, obias_ref,
         iscale_ref, ibias_ref, o_ref, acc_mu, acc_var) = refs
    else:
        (x_ref, wmu_ref, wvar_ref, noise_ref, oscale_ref, obias_ref,
         o_ref, acc_mu, acc_var) = refs
        iscale_ref = ibias_ref = None

    k = pl.program_id(2)

    @pl.when(k == 0)
    def _init():
        acc_mu[...] = jnp.zeros_like(acc_mu)
        acc_var[...] = jnp.zeros_like(acc_var)

    x = x_ref[...]                                   # (tm, tk) f32
    if mod_inputs:
        x = x * iscale_ref[...] + ibias_ref[...]     # broadcast (1, tk)

    # bf16 MXU operands, f32 accumulation.
    x_bf = x.astype(jnp.bfloat16)
    x2_bf = (x * x).astype(jnp.bfloat16)

    acc_mu[...] += jnp.dot(x_bf, wmu_ref[...],
                           preferred_element_type=jnp.float32)
    acc_var[...] += jnp.dot(x2_bf, wvar_ref[...],
                            preferred_element_type=jnp.float32)

    @pl.when(k == pl.num_programs(2) - 1)
    def _finalize():
        var = jnp.maximum(acc_var[...], 0.0)         # guard sqrt against -0/rounding
        y = acc_mu[...] + noise_ref[...] * jnp.sqrt(var)
        o_ref[...] = (y * oscale_ref[...] + obias_ref[...]).astype(o_ref.dtype)


def _round_up(a, b):
    return (a + b - 1) // b * b


def pbit_linear(x, params, noise, *, mod_inputs=False, tm=512, tn=256, tk=512):
    """Forward pass of PBitLinear.

    x:      (B, S, K) float32
    noise:  (B, S, N) float32  -- the torch.randn_like(mu) sample
    params: up_bits (N,K), down_bits (N,K), out_scale/out_bias (1,1,N),
            and (if mod_inputs) in_scale/in_bias (1,1,K)
    returns (B, S, N) float32

    Default tiles (tm=512, tn=256, tk=512) fit comfortably in v7x's 64 MiB VMEM
    and are clamped to the (padded) problem size for small shapes.
    """
    B, S, K = x.shape
    N = params["up_bits"].shape[0]
    M = B * S

    # One-time weight transform, hoisted out of the per-tile hot loop:
    # sigmoid on EUP once, pre-transpose to (K, N) so the kernel does plain
    # (tm,tk)x(tk,tn) matmuls, cast to bf16 (halves weight HBM traffic).
    up = jax.nn.sigmoid(params["up_bits"].astype(jnp.float32))
    down = jax.nn.sigmoid(params["down_bits"].astype(jnp.float32))
    w_mu = (up - down).T.astype(jnp.bfloat16)                             # (K, N)
    w_var = (up * (1.0 - up) + down * (1.0 - down)).T.astype(jnp.bfloat16)

    # Lane/sublane-aligned tiles; clamp for small problems and zero-pad so every
    # block is full (zeros are exact no-ops for both reductions).
    tm = min(tm, _round_up(M, 8))
    tn = min(tn, _round_up(N, 128))
    tk = min(tk, _round_up(K, 128))
    Mp, Np, Kp = _round_up(M, tm), _round_up(N, tn), _round_up(K, tk)

    x2d = jnp.pad(x.reshape(M, K).astype(jnp.float32),
                  ((0, Mp - M), (0, Kp - K)))
    noise2d = jnp.pad(noise.reshape(M, N).astype(jnp.float32),
                      ((0, Mp - M), (0, Np - N)))
    w_mu = jnp.pad(w_mu, ((0, Kp - K), (0, Np - N)))
    w_var = jnp.pad(w_var, ((0, Kp - K), (0, Np - N)))
    out_scale = jnp.pad(params["out_scale"].reshape(1, N).astype(jnp.float32),
                        ((0, 0), (0, Np - N)))
    out_bias = jnp.pad(params["out_bias"].reshape(1, N).astype(jnp.float32),
                       ((0, 0), (0, Np - N)))

    inputs = [x2d, w_mu, w_var, noise2d, out_scale, out_bias]
    in_specs = [
        pl.BlockSpec((tm, tk), lambda i, j, k: (i, k)),   # x
        pl.BlockSpec((tk, tn), lambda i, j, k: (k, j)),   # w_mu  (K, N)
        pl.BlockSpec((tk, tn), lambda i, j, k: (k, j)),   # w_var (K, N)
        pl.BlockSpec((tm, tn), lambda i, j, k: (i, j)),   # noise (used at k==last)
        pl.BlockSpec((1, tn), lambda i, j, k: (0, j)),    # out_scale
        pl.BlockSpec((1, tn), lambda i, j, k: (0, j)),    # out_bias
    ]
    if mod_inputs:
        in_scale = jnp.pad(params["in_scale"].reshape(1, K).astype(jnp.float32),
                           ((0, 0), (0, Kp - K)))
        in_bias = jnp.pad(params["in_bias"].reshape(1, K).astype(jnp.float32),
                          ((0, 0), (0, Kp - K)))
        inputs += [in_scale, in_bias]
        in_specs += [
            pl.BlockSpec((1, tk), lambda i, j, k: (0, k)),
            pl.BlockSpec((1, tk), lambda i, j, k: (0, k)),
        ]

    grid = (Mp // tm, Np // tn, Kp // tk)

    cost = pl.CostEstimate(
        flops=4 * M * N * K,                 # two M*N*K matmuls
        transcendentals=M * N,               # sqrt at finalize
        bytes_accessed=(Mp * Kp * 4          # x (f32)
                        + 2 * Kp * Np * 2    # two bf16 weight tensors
                        + Mp * Np * 4        # noise
                        + Mp * Np * 4),      # output
    )

    out2d = pl.pallas_call(
        functools.partial(_pbit_linear_kernel, mod_inputs),
        out_shape=jax.ShapeDtypeStruct((Mp, Np), jnp.float32),
        grid_spec=pltpu.PrefetchScalarGridSpec(
            num_scalar_prefetch=0,
            grid=grid,
            in_specs=in_specs,
            out_specs=pl.BlockSpec((tm, tn), lambda i, j, k: (i, j)),
            scratch_shapes=[pltpu.VMEM((tm, tn), jnp.float32),   # acc_mu
                            pltpu.VMEM((tm, tn), jnp.float32)],  # acc_var
        ),
        compiler_params=pltpu.CompilerParams(
            dimension_semantics=("parallel", "parallel", "arbitrary"),
            vmem_limit_bytes=48 * 1024 * 1024,   # safe on v7x's 64 MiB physical VMEM
        ),
        cost_estimate=cost,
    )(*inputs)

    return out2d[:M, :N].reshape(B, S, N)


def init_pbit_linear_params(key, in_features, out_features, mod_inputs=False):
    """Deterministic parameter init mirroring the PyTorch __init__."""
    k_up, k_down = jax.random.split(key, 2)
    up_p = 0.1 + jax.random.uniform(k_up, (out_features, in_features)) * 0.8
    down_p = 0.1 + jax.random.uniform(k_down, (out_features, in_features)) * 0.8
    params = {
        "up_bits": jnp.log(up_p / (1.0 - up_p)).astype(jnp.float32),
        "down_bits": jnp.log(down_p / (1.0 - down_p)).astype(jnp.float32),
        "out_bias": jnp.zeros((1, 1, out_features), jnp.float32),
        "out_scale": jnp.ones((1, 1, out_features), jnp.float32)
                     * (3.0 / np.sqrt(in_features)),
    }
    if mod_inputs:
        params["in_bias"] = jnp.zeros((1, 1, in_features), jnp.float32)
        params["in_scale"] = jnp.ones((1, 1, in_features), jnp.float32)
    return params


def pbit_linear_ref(x, params, noise, *, mod_inputs=False):
    """Pure-JAX f32 reference mirroring the PyTorch forward."""
    if mod_inputs:
        x = x * params["in_scale"] + params["in_bias"]
    up = jax.nn.sigmoid(params["up_bits"])
    down = jax.nn.sigmoid(params["down_bits"])
    w_mu = up - down
    w_var = up * (1.0 - up) + down * (1.0 - down)
    mu = jnp.einsum("bsk,nk->bsn", x, w_mu)
    var = jnp.einsum("bsk,nk->bsn", x * x, w_var)
    y = mu + noise * jnp.sqrt(var)
    return y * params["out_scale"] + params["out_bias"]


if __name__ == "__main__":
    key = jax.random.PRNGKey(0)

    # --- Test 1: small shapes (single-tile grid), mod_inputs=True ------------
    B, S, IN_F, OUT_F = 2, 8, 32, 32
    k_param, k_x, k_noise, key = jax.random.split(key, 4)
    params = init_pbit_linear_params(k_param, IN_F, OUT_F, mod_inputs=True)
    x = jax.random.normal(k_x, (B, S, IN_F), jnp.float32)
    noise = jax.random.normal(k_noise, (B, S, OUT_F), jnp.float32)

    out = jax.block_until_ready(pbit_linear(x, params, noise, mod_inputs=True))
    ref = pbit_linear_ref(x, params, noise, mod_inputs=True)
    # bf16 MXU operands with f32 accumulation -> loosened tolerance vs f32 ref.
    np.testing.assert_allclose(np.asarray(out), np.asarray(ref),
                               rtol=3e-2, atol=3e-2)

    # --- Test 2: multi-tile (i, j, k) grid exercising the K-accumulator path -
    B, S, IN_F, OUT_F = 8, 128, 1024, 512
    k_param, k_x, k_noise, key = jax.random.split(key, 4)
    params = init_pbit_linear_params(k_param, IN_F, OUT_F, mod_inputs=False)
    x = jax.random.normal(k_x, (B, S, IN_F), jnp.float32)
    noise = jax.random.normal(k_noise, (B, S, OUT_F), jnp.float32)

    out = jax.block_until_ready(pbit_linear(x, params, noise, mod_inputs=False))
    ref = pbit_linear_ref(x, params, noise, mod_inputs=False)
    np.testing.assert_allclose(np.asarray(out), np.asarray(ref),
                               rtol=5e-2, atol=5e-2)

    print("KERNEL_OK")
</pallas_src>

<mosaic_0001>
module attributes {stable_mosaic.version = 11 : i64} {
  func.func @_pbit_linear_kernel(%arg0: i32, %arg1: i32, %arg2: i32, %arg3: memref<16x128xf32, #tpu.memory_space<vmem>>, %arg4: memref<128x128xbf16, #tpu.memory_space<vmem>>, %arg5: memref<128x128xbf16, #tpu.memory_space<vmem>>, %arg6: memref<16x128xf32, #tpu.memory_space<vmem>>, %arg7: memref<1x128xf32, #tpu.memory_space<vmem>>, %arg8: memref<1x128xf32, #tpu.memory_space<vmem>>, %arg9: memref<1x128xf32, #tpu.memory_space<vmem>>, %arg10: memref<1x128xf32, #tpu.memory_space<vmem>>, %arg11: memref<16x128xf32, #tpu.memory_space<vmem>>, %arg12: memref<16x128xf32, #tpu.memory_space<vmem>>, %arg13: memref<16x128xf32, #tpu.memory_space<vmem>>) attributes {dimension_semantics = [#tpu.dimension_semantics<parallel>, #tpu.dimension_semantics<parallel>, #tpu.dimension_semantics<arbitrary>], iteration_bounds = array<i64: 1, 1, 1>, scalar_prefetch = 0 : i64, scratch_operands = 2 : i64, tpu.core_type = #tpu.core_type<tc>, window_params = [{transform_indices = @transform_0, window_bounds = array<i64: 16, 128>}, {transform_indices = @transform_1, window_bounds = array<i64: 128, 128>}, {transform_indices = @transform_2, window_bounds = array<i64: 128, 128>}, {transform_indices = @transform_3, window_bounds = array<i64: 16, 128>}, {transform_indices = @transform_4, window_bounds = array<i64: 1, 128>}, {transform_indices = @transform_5, window_bounds = array<i64: 1, 128>}, {transform_indices = @transform_6, window_bounds = array<i64: 1, 128>}, {transform_indices = @transform_7, window_bounds = array<i64: 1, 128>}, {transform_indices = @transform_8, window_bounds = array<i64: 16, 128>}]} {
    %c0_i32 = arith.constant 0 : i32
    %0 = arith.cmpi eq, %arg2, %c0_i32 : i32
    %1 = arith.extui %0 : i1 to i32
    %c0_i32_0 = arith.constant 0 : i32
    %2 = arith.cmpi ne, %1, %c0_i32_0 : i32
    scf.if %2 {
      %cst_21 = arith.constant 0.000000e+00 : f32
      %26 = vector.broadcast %cst_21 : f32 to vector<16x128xf32>
      %c0_22 = arith.constant 0 : index
      %c0_23 = arith.constant 0 : index
      %27 = vector.load %arg12[%c0_22, %c0_23] : memref<16x128xf32, #tpu.memory_space<vmem>>, vector<16x128xf32>
      tpu.vector_store %arg12[%c0_22, %c0_23], %26 {strides = array<i32>} : memref<16x128xf32, #tpu.memory_space<vmem>>, vector<16x128xf32>,
      %cst_24 = arith.constant 0.000000e+00 : f32
      %28 = vector.broadcast %cst_24 : f32 to vector<16x128xf32>
      %c0_25 = arith.constant 0 : index
      %c0_26 = arith.constant 0 : index
      %29 = vector.load %arg13[%c0_25, %c0_26] : memref<16x128xf32, #tpu.memory_space<vmem>>, vector<16x128xf32>
      tpu.vector_store %arg13[%c0_25, %c0_26], %28 {strides = array<i32>} : memref<16x128xf32, #tpu.memory_space<vmem>>, vector<16x128xf32>,
    } else {
    }
    %c0 = arith.constant 0 : index
    %c0_1 = arith.constant 0 : index
    %3 = vector.load %arg3[%c0, %c0_1] : memref<16x128xf32, #tpu.memory_space<vmem>>, vector<16x128xf32>
    %c0_2 = arith.constant 0 : index
    %c0_3 = arith.constant 0 : index
    %4 = vector.load %arg9[%c0_2, %c0_3] : memref<1x128xf32, #tpu.memory_space<vmem>>, vector<1x128xf32>
    %5 = vector.broadcast %4 : vector<1x128xf32> to vector<16x128xf32>
    %6 = arith.mulf %3, %5 : vector<16x128xf32>
    %c0_4 = arith.constant 0 : index
    %c0_5 = arith.constant 0 : index
    %7 = vector.load %arg10[%c0_4, %c0_5] : memref<1x128xf32, #tpu.memory_space<vmem>>, vector<1x128xf32>
    %8 = vector.broadcast %7 : vector<1x128xf32> to vector<16x128xf32>
    %9 = arith.addf %6, %8 : vector<16x128xf32>
    %10 = arith.truncf %9 : vector<16x128xf32> to vector<16x128xbf16>
    %11 = arith.mulf %9, %9 : vector<16x128xf32>
    %12 = arith.truncf %11 : vector<16x128xf32> to vector<16x128xbf16>
    %c0_6 = arith.constant 0 : index
    %c0_7 = arith.constant 0 : index
    %13 = vector.load %arg12[%c0_6, %c0_7] : memref<16x128xf32, #tpu.memory_space<vmem>>, vector<16x128xf32>
    %c0_8 = arith.constant 0 : index
    %c0_9 = arith.constant 0 : index
    %14 = vector.load %arg4[%c0_8, %c0_9] : memref<128x128xbf16, #tpu.memory_space<vmem>>, vector<128x128xbf16>
    %cst = arith.constant dense<0.000000e+00> : vector<16x128xf32>
    %15 = tpu.matmul %10, %14, %cst {dimension_numbers = #tpu.dot_dimension_numbers<[1], [0], [0], [1], [0, 0, 1, 1], [], []>} : vector<16x128xbf16>, vector<128x128xbf16>, vector<16x128xf32> -> vector<16x128xf32>
    %16 = arith.addf %13, %15 : vector<16x128xf32>
    %c0_10 = arith.constant 0 : index
    %c0_11 = arith.constant 0 : index
    %17 = vector.load %arg12[%c0_10, %c0_11] : memref<16x128xf32, #tpu.memory_space<vmem>>, vector<16x128xf32>
    tpu.vector_store %arg12[%c0_10, %c0_11], %16 {strides = array<i32>} : memref<16x128xf32, #tpu.memory_space<vmem>>, vector<16x128xf32>,
    %c0_12 = arith.constant 0 : index
    %c0_13 = arith.constant 0 : index
    %18 = vector.load %arg13[%c0_12, %c0_13] : memref<16x128xf32, #tpu.memory_space<vmem>>, vector<16x128xf32>
    %c0_14 = arith.constant 0 : index
    %c0_15 = arith.constant 0 : index
    %19 = vector.load %arg5[%c0_14, %c0_15] : memref<128x128xbf16, #tpu.memory_space<vmem>>, vector<128x128xbf16>
    %cst_16 = arith.constant dense<0.000000e+00> : vector<16x128xf32>
    %20 = tpu.matmul %12, %19, %cst_16 {dimension_numbers = #tpu.dot_dimension_numbers<[1], [0], [0], [1], [0, 0, 1, 1], [], []>} : vector<16x128xbf16>, vector<128x128xbf16>, vector<16x128xf32> -> vector<16x128xf32>
    %21 = arith.addf %18, %20 : vector<16x128xf32>
    %c0_17 = arith.constant 0 : index
    %c0_18 = arith.constant 0 : index
    %22 = vector.load %arg13[%c0_17, %c0_18] : memref<16x128xf32, #tpu.memory_space<vmem>>, vector<16x128xf32>
    tpu.vector_store %arg13[%c0_17, %c0_18], %21 {strides = array<i32>} : memref<16x128xf32, #tpu.memory_space<vmem>>, vector<16x128xf32>,
    %c0_i32_19 = arith.constant 0 : i32
    %23 = arith.cmpi eq, %arg2, %c0_i32_19 : i32
    %24 = arith.extui %23 : i1 to i32
    %c0_i32_20 = arith.constant 0 : i32
    %25 = arith.cmpi ne, %24, %c0_i32_20 : i32
    scf.if %25 {
      %c0_21 = arith.constant 0 : index
      %c0_22 = arith.constant 0 : index
      %26 = vector.load %arg13[%c0_21, %c0_22] : memref<16x128xf32, #tpu.memory_space<vmem>>, vector<16x128xf32>
      %cst_23 = arith.constant 0.000000e+00 : f32
      %27 = vector.broadcast %cst_23 : f32 to vector<16x128xf32>
      %28 = arith.maximumf %26, %27 : vector<16x128xf32>
      %c0_24 = arith.constant 0 : index
      %c0_25 = arith.constant 0 : index
      %29 = vector.load %arg12[%c0_24, %c0_25] : memref<16x128xf32, #tpu.memory_space<vmem>>, vector<16x128xf32>
      %c0_26 = arith.constant 0 : index
      %c0_27 = arith.constant 0 : index
      %30 = vector.load %arg6[%c0_26, %c0_27] : memref<16x128xf32, #tpu.memory_space<vmem>>, vector<16x128xf32>
      %31 = math.sqrt %28 : vector<16x128xf32>
      %32 = arith.mulf %30, %31 : vector<16x128xf32>
      %33 = arith.addf %29, %32 : vector<16x128xf32>
      %c0_28 = arith.constant 0 : index
      %c0_29 = arith.constant 0 : index
      %34 = vector.load %arg7[%c0_28, %c0_29] : memref<1x128xf32, #tpu.memory_space<vmem>>, vector<1x128xf32>
      %35 = vector.broadcast %34 : vector<1x128xf32> to vector<16x128xf32>
      %36 = arith.mulf %33, %35 : vector<16x128xf32>
      %c0_30 = arith.constant 0 : index
      %c0_31 = arith.constant 0 : index
      %37 = vector.load %arg8[%c0_30, %c0_31] : memref<1x128xf32, #tpu.memory_space<vmem>>, vector<1x128xf32>
      %38 = vector.broadcast %37 : vector<1x128xf32> to vector<16x128xf32>
      %39 = arith.addf %36, %38 : vector<16x128xf32>
      %c0_32 = arith.constant 0 : index
      %c0_33 = arith.constant 0 : index
      %40 = vector.load %arg11[%c0_32, %c0_33] : memref<16x128xf32, #tpu.memory_space<vmem>>, vector<16x128xf32>
      tpu.vector_store %arg11[%c0_32, %c0_33], %39 {strides = array<i32>} : memref<16x128xf32, #tpu.memory_space<vmem>>, vector<16x128xf32>,
    } else {
    }
    return
  }
  func.func @transform_0(%arg0: i32, %arg1: i32, %arg2: i32) -> (i32, i32) {
    %c0_i32 = arith.constant 0 : i32
    return %arg0, %arg2 : i32, i32
  }
  func.func @transform_1(%arg0: i32, %arg1: i32, %arg2: i32) -> (i32, i32) {
    %c0_i32 = arith.constant 0 : i32
    return %arg2, %arg1 : i32, i32
  }
  func.func @transform_2(%arg0: i32, %arg1: i32, %arg2: i32) -> (i32, i32) {
    %c0_i32 = arith.constant 0 : i32
    return %arg2, %arg1 : i32, i32
  }
  func.func @transform_3(%arg0: i32, %arg1: i32, %arg2: i32) -> (i32, i32) {
    %c0_i32 = arith.constant 0 : i32
    return %arg0, %arg1 : i32, i32
  }
  func.func @transform_4(%arg0: i32, %arg1: i32, %arg2: i32) -> (i32, i32) {
    %c0_i32 = arith.constant 0 : i32
    %c0_i32_0 = arith.constant 0 : i32
    return %c0_i32, %arg1 : i32, i32
  }
  func.func @transform_5(%arg0: i32, %arg1: i32, %arg2: i32) -> (i32, i32) {
    %c0_i32 = arith.constant 0 : i32
    %c0_i32_0 = arith.constant 0 : i32
    return %c0_i32, %arg1 : i32, i32
  }
  func.func @transform_6(%arg0: i32, %arg1: i32, %arg2: i32) -> (i32, i32) {
    %c0_i32 = arith.constant 0 : i32
    %c0_i32_0 = arith.constant 0 : i32
    return %c0_i32, %arg2 : i32, i32
  }
  func.func @transform_7(%arg0: i32, %arg1: i32, %arg2: i32) -> (i32, i32) {
    %c0_i32 = arith.constant 0 : i32
    %c0_i32_0 = arith.constant 0 : i32
    return %c0_i32, %arg2 : i32, i32
  }
  func.func @transform_8(%arg0: i32, %arg1: i32, %arg2: i32) -> (i32, i32) {
    %c0_i32 = arith.constant 0 : i32
    return %arg0, %arg1 : i32, i32
  }
}

</mosaic_0001>

<llo_original>
// kernel: tpu_custom_call.1
$region0: #{tpu_custom_call.1}
  #allocation0 [shape = 'u32[]', space=smem, size = 0x4, offset = 0x4, fixed_abs, tag = 'smem constant byte address 0x4 - core index']
  #allocation1 [shape = 'u32[72,128]{1,0:T(1,128)}', space=vmem, size = 0x9000, scoped, tag = 'internal scratch']
  #allocation2 [shape = 'f32[16,128]{1,0:T(8,128)}', space=vmem, size = 0x2000, scoped, tag = 'scratch operand']
  #allocation3 [shape = 'f32[16,128]{1,0:T(8,128)}', space=vmem, size = 0x2000, scoped, tag = 'scratch operand']
  %s0 = inlined_call_operand.hbm [shape: f32[16,128], index: 0, kind: input, shape index: {}]
  %s1 = inlined_call_operand.hbm [shape: bf16[128,128], index: 1, kind: input, shape index: {}]
  %s2 = inlined_call_operand.hbm [shape: bf16[128,128], index: 2, kind: input, shape index: {}]
  %s3 = inlined_call_operand.hbm [shape: f32[16,128], index: 3, kind: input, shape index: {}]
  %s4 = inlined_call_operand.vmem [shape: f32[1,128], index: 4, kind: input, shape index: {}]
  %s5 = inlined_call_operand.vmem [shape: f32[1,128], index: 5, kind: input, shape index: {}]
  %s6 = inlined_call_operand.vmem [shape: f32[1,128], index: 6, kind: input, shape index: {}]
  %s7 = inlined_call_operand.vmem [shape: f32[1,128], index: 7, kind: input, shape index: {}]
  %s8 = inlined_call_operand.hbm [shape: f32[16,128], index: 8, kind: output, shape index: {}]
  %s9 = sld [smem:[#allocation0]]
  $region66: #{tpu_custom_call.1} parent=0
    _
  %s11 = ssub.s32 1, %s9
  %s12 = scalar_select 0, %s11, %s9
  $region1: #{tpu_custom_call.1} parent=0
    #allocation4 [shape = 'u8[8192]{0}', space=vmem, size = 0x2000, scoped, tag = 'input window, operand 0, single buffered']
    #allocation5 [shape = 's32[1]{0}', space=sflag, size = 0x4, scoped, tag = 'scoped memory for tpu_custom_call.1']
    #allocation6 [shape = 's32[1]{0}', space=sflag, size = 0x4, scoped, tag = 'scoped memory for tpu_custom_call.1']
    #allocation7 [shape = 'u8[32768]{0}', space=vmem, size = 0x8000, scoped, tag = 'input window, operand 1, single buffered']
    #allocation8 [shape = 's32[1]{0}', space=sflag, size = 0x4, scoped, tag = 'scoped memory for tpu_custom_call.1']
    #allocation9 [shape = 'u8[32768]{0}', space=vmem, size = 0x8000, scoped, tag = 'input window, operand 2, single buffered']
    #allocation10 [shape = 'u8[8192]{0}', space=vmem, size = 0x2000, scoped, tag = 'input window, operand 3, single buffered']
    #allocation11 [shape = 's32[1]{0}', space=sflag, size = 0x4, scoped, tag = 'scoped memory for tpu_custom_call.1']
    #allocation12 [shape = 'u8[8192]{0}', space=vmem, size = 0x2000, scoped, tag = 'output window, operand 0, single buffered']
    %13 = vsyncpa [#allocation5], 0
    %14 = vsyncpa [#allocation8], 0
    %15 = vsyncpa [#allocation11], 0
    %16 = vsyncpa [#allocation6], 0
    // Predicated region
    $region2: #{tpu_custom_call.1} parent=1 // pred_check
      _
    $region3: #{tpu_custom_call.1} parent=1 // pred_check_branch
      %18 = sbr.rel (0) target = $region5
    $region4: #{tpu_custom_call.1} parent=1 // pred_region
      %20 = vsyncadd [#allocation5], 0
      %s21 = sshll.u32 %s0, 4
      %s22 = int_to_ptr.hbm [resolvable:$true] %s21
      %s23 = sshll.u32 [#allocation4], 4
      %s24 = int_to_ptr.vmem [resolvable:$true] %s23
      %29 = dma.hbm_to_vmem [thread:$0]  %s22, 256, %s24, [#allocation5], 128, 128, 8
    $region5: #{tpu_custom_call.1} parent=1 // pred_fallthru
      _
    // Predicated region
    $region6: #{tpu_custom_call.1} parent=1 // pred_check
      _
    $region7: #{tpu_custom_call.1} parent=1 // pred_check_branch
      %31 = sbr.rel (0) target = $region9
    $region8: #{tpu_custom_call.1} parent=1 // pred_region
      %33 = vsyncadd [#allocation8], 0
      %s34 = sshll.u32 %s1, 4
      %s35 = int_to_ptr.hbm [resolvable:$true] %s34
      %s36 = sshll.u32 [#allocation7], 4
      %s37 = int_to_ptr.vmem [resolvable:$true] %s36
      %42 = dma.hbm_to_vmem [thread:$0]  %s35, 1024, %s37, [#allocation8], 64, 64, 4
    $region9: #{tpu_custom_call.1} parent=1 // pred_fallthru
      _
    // Predicated region
    $region10: #{tpu_custom_call.1} parent=1 // pred_check
      _
    $region11: #{tpu_custom_call.1} parent=1 // pred_check_branch
      %44 = sbr.rel (0) target = $region13
    $region12: #{tpu_custom_call.1} parent=1 // pred_region
      %46 = vsyncadd [#allocation8], 0
      %s47 = sshll.u32 %s2, 4
      %s48 = int_to_ptr.hbm [resolvable:$true] %s47
      %s49 = sshll.u32 [#allocation9], 4
      %s50 = int_to_ptr.vmem [resolvable:$true] %s49
      %55 = dma.hbm_to_vmem [thread:$0]  %s48, 1024, %s50, [#allocation8], 64, 64, 4
    $region13: #{tpu_custom_call.1} parent=1 // pred_fallthru
      _
    // Predicated region
    $region14: #{tpu_custom_call.1} parent=1 // pred_check
      _
    $region15: #{tpu_custom_call.1} parent=1 // pred_check_branch
      %57 = sbr.rel (0) target = $region17
    $region16: #{tpu_custom_call.1} parent=1 // pred_region
      %59 = vsyncadd [#allocation11], 0
      %s60 = sshll.u32 %s3, 4
      %s61 = int_to_ptr.hbm [resolvable:$true] %s60
      %s62 = sshll.u32 [#allocation10], 4
      %s63 = int_to_ptr.vmem [resolvable:$true] %s62
      %68 = dma.hbm_to_vmem [thread:$0]  %s61, 256, %s63, [#allocation11], 128, 128, 8
    $region17: #{tpu_custom_call.1} parent=1 // pred_fallthru
      _
    // Predicated region
    $region18: #{tpu_custom_call.1} parent=1 // pred_check
      _
    $region19: #{tpu_custom_call.1} parent=1 // pred_check_branch
      %70 = sbr.rel (0) target = $region21
    $region20: #{tpu_custom_call.1} parent=1 // pred_region
      _
    $region21: #{tpu_custom_call.1} parent=1 // pred_fallthru
      _
    // Predicated region
    $region22: #{tpu_custom_call.1} parent=1 // pred_check
      _
    $region23: #{tpu_custom_call.1} parent=1 // pred_check_branch
      %72 = sbr.rel (0) target = $region25
    $region24: #{tpu_custom_call.1} parent=1 // pred_region
      _
    $region25: #{tpu_custom_call.1} parent=1 // pred_fallthru
      _
    // Predicated region
    $region26: #{tpu_custom_call.1} parent=1 // pred_check
      _
    $region27: #{tpu_custom_call.1} parent=1 // pred_check_branch
      %74 = sbr.rel (0) target = $region29
    $region28: #{tpu_custom_call.1} parent=1 // pred_region
      _
    $region29: #{tpu_custom_call.1} parent=1 // pred_fallthru
      _
    // Predicated region
    $region30: #{tpu_custom_call.1} parent=1 // pred_check
      _
    $region31: #{tpu_custom_call.1} parent=1 // pred_check_branch
      %76 = sbr.rel (0) target = $region33
    $region32: #{tpu_custom_call.1} parent=1 // pred_region
      _
    $region33: #{tpu_custom_call.1} parent=1 // pred_fallthru
      _
    // Predicated region
    $region34: #{tpu_custom_call.1} parent=1 // pred_check
      _
    $region35: #{tpu_custom_call.1} parent=1 // pred_check_branch
      %78 = sbr.rel (0) target = $region37
    $region36: #{tpu_custom_call.1} parent=1 // pred_region
      %80 = dma.done [#allocation5], 256
    $region37: #{tpu_custom_call.1} parent=1 // pred_fallthru
      _
    // Predicated region
    $region38: #{tpu_custom_call.1} parent=1 // pred_check
      _
    $region39: #{tpu_custom_call.1} parent=1 // pred_check_branch
      %82 = sbr.rel (0) target = $region41
    $region40: #{tpu_custom_call.1} parent=1 // pred_region
      %84 = dma.done [#allocation8], 1024
    $region41: #{tpu_custom_call.1} parent=1 // pred_fallthru
      _
    // Predicated region
    $region42: #{tpu_custom_call.1} parent=1 // pred_check
      _
    $region43: #{tpu_custom_call.1} parent=1 // pred_check_branch
      %86 = sbr.rel (0) target = $region45
    $region44: #{tpu_custom_call.1} parent=1 // pred_region
      %88 = dma.done [#allocation8], 1024
    $region45: #{tpu_custom_call.1} parent=1 // pred_fallthru
      _
    // Predicated region
    $region46: #{tpu_custom_call.1} parent=1 // pred_check
      _
    $region47: #{tpu_custom_call.1} parent=1 // pred_check_branch
      %90 = sbr.rel (0) target = $region49
    $region48: #{tpu_custom_call.1} parent=1 // pred_region
      %92 = dma.done [#allocation11], 256
    $region49: #{tpu_custom_call.1} parent=1 // pred_fallthru
      _
    %p93 = scmp.eq.s32.totalorder 0, 0
    // Predicated region
    $region50: #{tpu_custom_call.1} parent=1 // pred_check
      %p94 = pneg %p93
    $region51: #{tpu_custom_call.1} parent=1 // pred_check_branch
      %96 = sbr.rel (%p94) target = $region53
    $region52: #{tpu_custom_call.1} parent=1 // pred_region
      %97 = vst [vmem:[#allocation2] sm:$0xff] 0.0
      %98 = vst [vmem:[#allocation2 + $0x8] sm:$0xff] 0.0
      %99 = vst [vmem:[#allocation3] sm:$0xff] 0.0
      %100 = vst [vmem:[#allocation3 + $0x8] sm:$0xff] 0.0
    $region53: #{tpu_custom_call.1} parent=1 // pred_fallthru
      _
    %v101 = vld [vmem:[#allocation4] sm:$0xff]
    %v102 = vld [vmem:[#allocation4 + $0x8] sm:$0xff]
    %v103 = vld [vmem:[%s6] sm:$0x1]
    %v105 = vperm.slane %v103, 0
    %v107 = vmul.f32 %v101, %v105
    %v108 = vmul.f32 %v102, %v105
    %v109 = vld [vmem:[%s7] sm:$0x1]
    %v111 = vperm.slane %v109, 0
    %v113 = vadd.f32 %v107, %v111
    %v114 = vadd.f32 %v108, %v111
    %v115 = vpack.c.bf16 %v114, %v113
    %v116 = vmul.f32 %v113, %v113
    %v117 = vmul.f32 %v114, %v114
    %v118 = vpack.c.bf16 %v117, %v116
    %v119 = vld [vmem:[#allocation2] sm:$0xff]
    %v120 = vld [vmem:[#allocation2 + $0x8] sm:$0xff]
    %v121 = vld [vmem:[#allocation7] sm:$0xf]
    %v122 = vld [vmem:[#allocation7 + $0x4] sm:$0xf]
    %v123 = vld [vmem:[#allocation7 + $0x8] sm:$0xf]
    %v124 = vld [vmem:[#allocation7 + $0xc] sm:$0xf]
    %v125 = vld [vmem:[#allocation7 + $0x10] sm:$0xf]
    %v126 = vld [vmem:[#allocation7 + $0x14] sm:$0xf]
    %v127 = vld [vmem:[#allocation7 + $0x18] sm:$0xf]
    %v128 = vld [vmem:[#allocation7 + $0x1c] sm:$0xf]
    %v129 = vld [vmem:[#allocation7 + $0x20] sm:$0xf]
    %v130 = vld [vmem:[#allocation7 + $0x24] sm:$0xf]
    %v131 = vld [vmem:[#allocation7 + $0x28] sm:$0xf]
    %v132 = vld [vmem:[#allocation7 + $0x2c] sm:$0xf]
    %v133 = vld [vmem:[#allocation7 + $0x30] sm:$0xf]
    %v134 = vld [vmem:[#allocation7 + $0x34] sm:$0xf]
    %v135 = vld [vmem:[#allocation7 + $0x38] sm:$0xf]
    %v136 = vld [vmem:[#allocation7 + $0x3c] sm:$0xf]
    %v153 = vunpack.c.l.b16 %v121
    %v154 = vunpack.c.l.b16 %v122
    %v155 = vunpack.c.l.b16 %v123
    %v156 = vunpack.c.l.b16 %v124
    %v157 = vunpack.c.l.b16 %v125
    %v158 = vunpack.c.l.b16 %v126
    %v159 = vunpack.c.l.b16 %v127
    %v160 = vunpack.c.l.b16 %v128
    %v161 = vunpack.c.l.b16 %v129
    %v162 = vunpack.c.l.b16 %v130
    %v163 = vunpack.c.l.b16 %v131
    %v164 = vunpack.c.l.b16 %v132
    %v165 = vunpack.c.l.b16 %v133
    %v166 = vunpack.c.l.b16 %v134
    %v167 = vunpack.c.l.b16 %v135
    %v168 = vunpack.c.l.b16 %v136
    %v169 = vpack.c.b16 %v154, %v153
    %v170 = vpack.c.b16 %v156, %v155
    %v171 = vpack.c.b16 %v158, %v157
    %v172 = vpack.c.b16 %v160, %v159
    %v173 = vpack.c.b16 %v162, %v161
    %v174 = vpack.c.b16 %v164, %v163
    %v175 = vpack.c.b16 %v166, %v165
    %v176 = vpack.c.b16 %v168, %v167
    %185 = vmatpush.bf16.msra.mxu0 %v176
    %186 = vmatpush.bf16.msra.mxu0 %v175
    %187 = vmatpush.bf16.msra.mxu0 %v174
    %188 = vmatpush.bf16.msra.mxu0 %v173
    %189 = vmatpush.bf16.msra.mxu0 %v172
    %190 = vmatpush.bf16.msra.mxu0 %v171
    %191 = vmatpush.bf16.msra.mxu0 %v170
    %192 = vmatpush.bf16.msra.mxu0 %v169
    %193 = vmatmul.bf16.gmra.mxu0 %v115
    %v194 = vpop.f32.mrf.mxu0
    %v195 = vadd.f32 0.0, %v194
    %v196 = vpop.f32.mrf.mxu0
    %v197 = vadd.f32 0.0, %v196
    %198 = vdwg.mxu0
    %v199 = vadd.f32 %v119, %v195
    %v200 = vadd.f32 %v120, %v197
    %201 = vst [vmem:[#allocation2] sm:$0xff] %v199
    %202 = vst [vmem:[#allocation2 + $0x8] sm:$0xff] %v200
    %v203 = vld [vmem:[#allocation3] sm:$0xff]
    %v204 = vld [vmem:[#allocation3 + $0x8] sm:$0xff]
    %v205 = vld [vmem:[#allocation9] sm:$0xf]
    %v206 = vld [vmem:[#allocation9 + $0x4] sm:$0xf]
    %v207 = vld [vmem:[#allocation9 + $0x8] sm:$0xf]
    %v208 = vld [vmem:[#allocation9 + $0xc] sm:$0xf]
    %v209 = vld [vmem:[#allocation9 + $0x10] sm:$0xf]
    %v210 = vld [vmem:[#allocation9 + $0x14] sm:$0xf]
    %v211 = vld [vmem:[#allocation9 + $0x18] sm:$0xf]
    %v212 = vld [vmem:[#allocation9 + $0x1c] sm:$0xf]
    %v213 = vld [vmem:[#allocation9 + $0x20] sm:$0xf]
    %v214 = vld [vmem:[#allocation9 + $0x24] sm:$0xf]
    %v215 = vld [vmem:[#allocation9 + $0x28] sm:$0xf]
    %v216 = vld [vmem:[#allocation9 + $0x2c] sm:$0xf]
    %v217 = vld [vmem:[#allocation9 + $0x30] sm:$0xf]
    %v218 = vld [vmem:[#allocation9 + $0x34] sm:$0xf]
    %v219 = vld [vmem:[#allocation9 + $0x38] sm:$0xf]
    %v220 = vld [vmem:[#allocation9 + $0x3c] sm:$0xf]
    %v237 = vunpack.c.l.b16 %v205
    %v238 = vunpack.c.l.b16 %v206
    %v239 = vunpack.c.l.b16 %v207
    %v240 = vunpack.c.l.b16 %v208
    %v241 = vunpack.c.l.b16 %v209
    %v242 = vunpack.c.l.b16 %v210
    %v243 = vunpack.c.l.b16 %v211
    %v244 = vunpack.c.l.b16 %v212
    %v245 = vunpack.c.l.b16 %v213
    %v246 = vunpack.c.l.b16 %v214
    %v247 = vunpack.c.l.b16 %v215
    %v248 = vunpack.c.l.b16 %v216
    %v249 = vunpack.c.l.b16 %v217
    %v250 = vunpack.c.l.b16 %v218
    %v251 = vunpack.c.l.b16 %v219
    %v252 = vunpack.c.l.b16 %v220
    %v253 = vpack.c.b16 %v238, %v237
    %v254 = vpack.c.b16 %v240, %v239
    %v255 = vpack.c.b16 %v242, %v241
    %v256 = vpack.c.b16 %v244, %v243
    %v257 = vpack.c.b16 %v246, %v245
    %v258 = vpack.c.b16 %v248, %v247
    %v259 = vpack.c.b16 %v250, %v249
    %v260 = vpack.c.b16 %v252, %v251
    %269 = vmatpush.bf16.msra.mxu0 %v260
    %270 = vmatpush.bf16.msra.mxu0 %v259
    %271 = vmatpush.bf16.msra.mxu0 %v258
    %272 = vmatpush.bf16.msra.mxu0 %v257
    %273 = vmatpush.bf16.msra.mxu0 %v256
    %274 = vmatpush.bf16.msra.mxu0 %v255
    %275 = vmatpush.bf16.msra.mxu0 %v254
    %276 = vmatpush.bf16.msra.mxu0 %v253
    %277 = vmatmul.bf16.gmra.mxu0 %v118
    %v278 = vpop.f32.mrf.mxu0
    %v279 = vadd.f32 0.0, %v278
    %v280 = vpop.f32.mrf.mxu0
    %v281 = vadd.f32 0.0, %v280
    %282 = vdwg.mxu0
    %v283 = vadd.f32 %v203, %v279
    %v284 = vadd.f32 %v204, %v281
    %285 = vst [vmem:[#allocation3] sm:$0xff] %v283
    %286 = vst [vmem:[#allocation3 + $0x8] sm:$0xff] %v284
    // Predicated region
    $region54: #{tpu_custom_call.1} parent=1 // pred_check
      %p287 = pneg %p93
    $region55: #{tpu_custom_call.1} parent=1 // pred_check_branch
      %289 = sbr.rel (%p287) target = $region57
    $region56: #{tpu_custom_call.1} parent=1 // pred_region
      %v290 = vld [vmem:[#allocation3] sm:$0xff]
      %v291 = vld [vmem:[#allocation3 + $0x8] sm:$0xff]
      %v292 = vmax.f32 %v290, 0.0
      %v293 = vmax.f32 %v291, 0.0
      %v294 = vld [vmem:[#allocation2] sm:$0xff]
      %v295 = vld [vmem:[#allocation2 + $0x8] sm:$0xff]
      %v296 = vld [vmem:[#allocation10] sm:$0xff]
      %v297 = vld [vmem:[#allocation10 + $0x8] sm:$0xff]
      %v298 = vrsqrt.pop %v292
      %v299 = vmul.f32 %v298, %v292
      %v300 = vmul.f32 %v299, %v298
      %v301 = vmul.f32 0.5, %v300
      %v302 = vsub.f32 1.5, %v301
      %v303 = vmul.f32 %v298, %v302
      %v304 = vmul.f32 %v292, %v303
      %vm305 = vcmp.eq.f32.partialorder %v292, inf
      %v306 = vsel %vm305, %v292, %v304
      %vm307 = vcmp.eq.f32.partialorder %v292, 0.0
      %v308 = vand.u32 %v292, 2147483648
      %v309 = vsel %vm307, %v308, %v306
      %v310 = vrsqrt.pop %v293
      %v311 = vmul.f32 %v310, %v293
      %v312 = vmul.f32 %v311, %v310
      %v313 = vmul.f32 0.5, %v312
      %v314 = vsub.f32 1.5, %v313
      %v315 = vmul.f32 %v310, %v314
      %v316 = vmul.f32 %v293, %v315
      %vm317 = vcmp.eq.f32.partialorder %v293, inf
      %v318 = vsel %vm317, %v293, %v316
      %vm319 = vcmp.eq.f32.partialorder %v293, 0.0
      %v320 = vand.u32 %v293, 2147483648
      %v321 = vsel %vm319, %v320, %v318
      %v322 = vmul.f32 %v296, %v309
      %v323 = vmul.f32 %v297, %v321
      %v324 = vadd.f32 %v294, %v322
      %v325 = vadd.f32 %v295, %v323
      %v326 = vld [vmem:[%s4] sm:$0x1]
      %v328 = vperm.slane %v326, 0
      %v330 = vmul.f32 %v324, %v328
      %v331 = vmul.f32 %v325, %v328
      %v332 = vld [vmem:[%s5] sm:$0x1]
      %v334 = vperm.slane %v332, 0
      %v336 = vadd.f32 %v330, %v334
      %v337 = vadd.f32 %v331, %v334
      %338 = vst [vmem:[#allocation12] sm:$0xff] %v336
      %339 = vst [vmem:[#allocation12 + $0x8] sm:$0xff] %v337
    $region57: #{tpu_custom_call.1} parent=1 // pred_fallthru
      _
    // Predicated region
    $region58: #{tpu_custom_call.1} parent=1 // pred_check
      _
    $region59: #{tpu_custom_call.1} parent=1 // pred_check_branch
      %341 = sbr.rel (0) target = $region61
    $region60: #{tpu_custom_call.1} parent=1 // pred_region
      %343 = vsyncadd [#allocation6], 0
      %s344 = sshll.u32 [#allocation12], 4
      %s345 = int_to_ptr.vmem [resolvable:$true] %s344
      %s346 = sshll.u32 %s8, 4
      %s347 = int_to_ptr.hbm [resolvable:$true] %s346
      %352 = dma.vmem_to_hbm [thread:$0]  %s345, 256, %s347, [#allocation6], 128, 128, 8
    $region61: #{tpu_custom_call.1} parent=1 // pred_fallthru
      _
    // Predicated region
    $region62: #{tpu_custom_call.1} parent=1 // pred_check
      _
    $region63: #{tpu_custom_call.1} parent=1 // pred_check_branch
      %354 = sbr.rel (0) target = $region65
    $region64: #{tpu_custom_call.1} parent=1 // pred_region
      %356 = dma.done [#allocation6], 256
    $region65: #{tpu_custom_call.1} parent=1 // pred_fallthru
      _
    %357 = vsyncpa [#allocation5], 1
    %358 = vsyncpa [#allocation8], 1
    %359 = vsyncpa [#allocation11], 1
    %360 = vsyncpa [#allocation6], 1

</llo_original>
